<compile_context>
chip_gen: v6e
topology: v6e:2x2x1
jax: 0.10.0
libtpu: 0.0.40
codegen_flags: <defaults>
</compile_context>

<pallas_src>
import functools

import jax
import jax.numpy as jnp
from jax.experimental import pallas as pl
from jax.experimental.pallas import tpu as pltpu

LANE = 128
SUBLANE = 8


def _round_up(n, m):
    return (n + m - 1) // m * m


def mlp_kernel(x_ref, w1_ref, b1_ref, w2_ref, b2_ref, w3_ref, b3_ref, o_ref):
    x = x_ref[...]  # (tile_b, n_in) f32

    # input_layer + Sigmoid (padded hidden lanes give sigmoid(0)=0.5, but the
    # matching rows of the next weight matrix are zero, so they contribute 0).
    h = jnp.dot(x, w1_ref[...], preferred_element_type=jnp.float32) + b1_ref[...]
    h = jax.nn.sigmoid(h)  # EUP transcendental, off the VALU slots

    # hidden_1 + Sigmoid
    h = jnp.dot(h, w2_ref[...], preferred_element_type=jnp.float32) + b2_ref[...]
    h = jax.nn.sigmoid(h)

    # output_layer: weights carry only the real n_out columns, so logits, the
    # softmax and the HBM store all stay at the true output width.
    logits = jnp.dot(h, w3_ref[...], preferred_element_type=jnp.float32) + b3_ref[...]

    # softmax over the feature axis (nn.Softmax() on 2-D input == dim=1)
    m = jnp.max(logits, axis=-1, keepdims=True)
    e = jnp.exp(logits - m)
    denom = jnp.sum(e, axis=-1, keepdims=True)
    o_ref[...] = e * pl.reciprocal(denom, approx=False)  # exact: keeps 1e-5 check


def prepare_params(params):
    """Pad internal (VMEM-resident) feature dims to 128 lanes ONCE, at init.

    Returns (padded_params, dims) where dims are the *real* (n_in, h0, h1, n_out),
    used only for the CostEstimate. The output layer keeps its real n_out columns.
    """
    (w1, b1), (w2, b2), (w3, b3) = params
    n_in, h0 = w1.shape
    h1, n_out = w3.shape
    h0p, h1p = _round_up(h0, LANE), _round_up(h1, LANE)

    w1p = jnp.zeros((n_in, h0p), jnp.float32).at[:, :h0].set(w1)
    b1p = jnp.zeros((1, h0p), jnp.float32).at[:, :h0].set(b1)
    w2p = jnp.zeros((h0p, h1p), jnp.float32).at[:h0, :h1].set(w2)
    b2p = jnp.zeros((1, h1p), jnp.float32).at[:, :h1].set(b2)
    w3p = jnp.zeros((h1p, n_out), jnp.float32).at[:h1, :].set(w3)
    b3p = b3.astype(jnp.float32).reshape(1, n_out)

    return (w1p, b1p, w2p, b2p, w3p, b3p), (n_in, h0, h1, n_out)


def _choose_tiling(batch, max_tile, num_cores=2):
    """Pick (tile_b, batch_p, grid) so batch is padded only to a multiple of 8,
    the grid stays a multiple of the TensorCore count (v7x megacore balance)
    once there is enough work, and tiles stay under max_tile rows."""
    batch_8 = _round_up(batch, SUBLANE)
    g = pl.cdiv(batch_8, max_tile)                     # minimum steps under the cap
    if batch_8 >= num_cores * 2 * SUBLANE:             # enough rows to split across TCs
        g = _round_up(max(g, num_cores), num_cores)
    tile_b = _round_up(pl.cdiv(batch_8, g), SUBLANE)
    batch_p = tile_b * g
    return tile_b, batch_p, g


@functools.partial(jax.jit, static_argnames=("dims", "max_tile"))
def neural_network_forward(x, padded_params, *, dims, max_tile=4096):
    """x: (batch, n_in) f32; padded_params/dims from prepare_params()."""
    w1p, b1p, w2p, b2p, w3p, b3p = padded_params
    n_in, h0, h1, n_out = dims
    batch = x.shape[0]
    h0p, h1p = w1p.shape[1], w2p.shape[1]

    tile_b, batch_p, g = _choose_tiling(batch, max_tile)
    xp = x if batch_p == batch else jnp.pad(x, ((0, batch_p - batch), (0, 0)))

    def resident(shape):  # same block every grid step -> stays VMEM-resident
        return pl.BlockSpec(shape, lambda i: (0, 0))

    # Honest (unpadded) cost estimate for XLA's scheduler.
    cost = pl.CostEstimate(
        flops=2 * batch * (n_in * h0 + h0 * h1 + h1 * n_out),
        transcendentals=batch * (h0 + h1 + n_out),
        bytes_accessed=4 * (batch * n_in + batch * n_out
                            + n_in * h0 + h0 * h1 + h1 * n_out
                            + h0 + h1 + n_out),
    )

    out = pl.pallas_call(
        mlp_kernel,
        out_shape=jax.ShapeDtypeStruct((batch_p, n_out), jnp.float32),
        grid=(g,),
        in_specs=[
            pl.BlockSpec((tile_b, n_in), lambda i: (i, 0)),   # streamed activation tile
            resident((n_in, h0p)), resident((1, h0p)),
            resident((h0p, h1p)), resident((1, h1p)),
            resident((h1p, n_out)), resident((1, n_out)),
        ],
        out_specs=pl.BlockSpec((tile_b, n_out), lambda i: (i, 0)),  # real-width output
        compiler_params=pltpu.CompilerParams(
            dimension_semantics=("parallel",),   # shard batch tiles across TCs (v7x)
            vmem_limit_bytes=32 * 1024 * 1024,   # working set is <1 MiB; ample headroom
        ),
        cost_estimate=cost,
    )(xp, w1p, b1p, w2p, b2p, w3p, b3p)

    return out[:batch]  # rows only — columns already at real n_out


def init_linear(key, fan_in, fan_out):
    """Deterministic init mimicking torch.nn.Linear default (uniform +/- 1/sqrt(fan_in))."""
    kw, kb = jax.random.split(key)
    bound = 1.0 / float(fan_in) ** 0.5
    w = jax.random.uniform(kw, (fan_in, fan_out), jnp.float32, -bound, bound)
    b = jax.random.uniform(kb, (1, fan_out), jnp.float32, -bound, bound)
    return w, b


def reference_forward(x, params):
    (w1, b1), (w2, b2), (w3, b3) = params
    a1 = jax.nn.sigmoid(x @ w1 + b1)
    a2 = jax.nn.sigmoid(a1 @ w2 + b2)
    return jax.nn.softmax(a2 @ w3 + b3, axis=-1)


# TODO(synk): loss_fn / fit / predict are training-time utilities (autograd, optimizer,
# plotting) with no forward-pass Pallas equivalent; only forward() is implemented.

if __name__ == "__main__":
    # NeuralNetwork(n_inputs=16, n_outputs=4, hidden_sizes=[8, 16])
    n_inputs, n_outputs = 16, 4
    hidden_sizes = [8, 16]

    root = jax.random.PRNGKey(0)
    kx, k1, k2, k3, kx2 = jax.random.split(root, 5)

    params = [
        init_linear(k1, n_inputs, hidden_sizes[0]),
        init_linear(k2, hidden_sizes[0], hidden_sizes[1]),
        init_linear(k3, hidden_sizes[1], n_outputs),
    ]
    padded_params, dims = prepare_params(params)   # padded once, not per forward call

    # Small check (single tile, no batch padding)
    batch = 8
    x = jax.random.normal(kx, (batch, n_inputs), dtype=jnp.float32)
    out = jax.block_until_ready(neural_network_forward(x, padded_params, dims=dims))
    ref = reference_forward(x, params)
    assert out.shape == (batch, n_outputs)
    assert jnp.allclose(out, ref, atol=1e-5, rtol=1e-5), "mismatch vs JAX reference (small)"
    assert jnp.allclose(jnp.sum(out, axis=-1), jnp.ones((batch,)), atol=1e-5)

    # Larger batch: exercises the even multi-step grid (2 tiles of 520 rows, zero padding).
    batch2 = 1040
    x2 = jax.random.normal(kx2, (batch2, n_inputs), dtype=jnp.float32)
    out2 = jax.block_until_ready(neural_network_forward(x2, padded_params, dims=dims))
    ref2 = reference_forward(x2, params)
    assert out2.shape == (batch2, n_outputs)
    assert jnp.allclose(out2, ref2, atol=1e-5, rtol=1e-5), "mismatch vs JAX reference (tiled)"
    assert jnp.allclose(jnp.sum(out2, axis=-1), jnp.ones((batch2,)), atol=1e-5)

    print("KERNEL_OK")
</pallas_src>

<mosaic_0001>
module attributes {stable_mosaic.version = 11 : i64} {
  func.func @mlp_kernel(%arg0: i32, %arg1: memref<8x16xf32, #tpu.memory_space<vmem>>, %arg2: memref<16x128xf32, #tpu.memory_space<vmem>>, %arg3: memref<1x128xf32, #tpu.memory_space<vmem>>, %arg4: memref<128x128xf32, #tpu.memory_space<vmem>>, %arg5: memref<1x128xf32, #tpu.memory_space<vmem>>, %arg6: memref<128x4xf32, #tpu.memory_space<vmem>>, %arg7: memref<1x4xf32, #tpu.memory_space<vmem>>, %arg8: memref<8x4xf32, #tpu.memory_space<vmem>>) attributes {dimension_semantics = [#tpu.dimension_semantics<parallel>], iteration_bounds = array<i64: 1>, scalar_prefetch = 0 : i64, scratch_operands = 0 : i64, tpu.core_type = #tpu.core_type<tc>, window_params = [{transform_indices = @transform_0, window_bounds = array<i64: 8, 16>}, {pipeline_mode = #tpu.pipeline_mode<synchronous>, transform_indices = @transform_1, window_bounds = array<i64: 16, 128>}, {pipeline_mode = #tpu.pipeline_mode<synchronous>, transform_indices = @transform_2, window_bounds = array<i64: 1, 128>}, {pipeline_mode = #tpu.pipeline_mode<synchronous>, transform_indices = @transform_3, window_bounds = array<i64: 128, 128>}, {pipeline_mode = #tpu.pipeline_mode<synchronous>, transform_indices = @transform_4, window_bounds = array<i64: 1, 128>}, {pipeline_mode = #tpu.pipeline_mode<synchronous>, transform_indices = @transform_5, window_bounds = array<i64: 128, 4>}, {pipeline_mode = #tpu.pipeline_mode<synchronous>, transform_indices = @transform_6, window_bounds = array<i64: 1, 4>}, {transform_indices = @transform_7, window_bounds = array<i64: 8, 4>}]} {
    %c0 = arith.constant 0 : index
    %c0_0 = arith.constant 0 : index
    %0 = vector.load %arg1[%c0, %c0_0] : memref<8x16xf32, #tpu.memory_space<vmem>>, vector<8x16xf32>
    %c0_1 = arith.constant 0 : index
    %c0_2 = arith.constant 0 : index
    %1 = vector.load %arg2[%c0_1, %c0_2] : memref<16x128xf32, #tpu.memory_space<vmem>>, vector<16x128xf32>
    %cst = arith.constant dense<0.000000e+00> : vector<8x128xf32>
    %2 = tpu.matmul %0, %1, %cst {dimension_numbers = #tpu.dot_dimension_numbers<[1], [0], [0], [1], [0, 0, 1, 1], [], []>} : vector<8x16xf32>, vector<16x128xf32>, vector<8x128xf32> -> vector<8x128xf32>
    %c0_3 = arith.constant 0 : index
    %c0_4 = arith.constant 0 : index
    %3 = vector.load %arg3[%c0_3, %c0_4] : memref<1x128xf32, #tpu.memory_space<vmem>>, vector<1x128xf32>
    %4 = vector.broadcast %3 : vector<1x128xf32> to vector<8x128xf32>
    %5 = arith.addf %2, %4 : vector<8x128xf32>
    %6 = arith.negf %5 : vector<8x128xf32>
    %7 = math.exp %6 : vector<8x128xf32>
    %cst_5 = arith.constant 1.000000e+00 : f32
    %8 = vector.broadcast %cst_5 : f32 to vector<8x128xf32>
    %9 = arith.addf %8, %7 : vector<8x128xf32>
    %10 = arith.divf %8, %9 : vector<8x128xf32>
    %c0_6 = arith.constant 0 : index
    %c0_7 = arith.constant 0 : index
    %11 = vector.load %arg4[%c0_6, %c0_7] : memref<128x128xf32, #tpu.memory_space<vmem>>, vector<128x128xf32>
    %cst_8 = arith.constant dense<0.000000e+00> : vector<8x128xf32>
    %12 = tpu.matmul %10, %11, %cst_8 {dimension_numbers = #tpu.dot_dimension_numbers<[1], [0], [0], [1], [0, 0, 1, 1], [], []>} : vector<8x128xf32>, vector<128x128xf32>, vector<8x128xf32> -> vector<8x128xf32>
    %c0_9 = arith.constant 0 : index
    %c0_10 = arith.constant 0 : index
    %13 = vector.load %arg5[%c0_9, %c0_10] : memref<1x128xf32, #tpu.memory_space<vmem>>, vector<1x128xf32>
    %14 = vector.broadcast %13 : vector<1x128xf32> to vector<8x128xf32>
    %15 = arith.addf %12, %14 : vector<8x128xf32>
    %16 = arith.negf %15 : vector<8x128xf32>
    %17 = math.exp %16 : vector<8x128xf32>
    %cst_11 = arith.constant 1.000000e+00 : f32
    %18 = vector.broadcast %cst_11 : f32 to vector<8x128xf32>
    %19 = arith.addf %18, %17 : vector<8x128xf32>
    %20 = arith.divf %18, %19 : vector<8x128xf32>
    %c0_12 = arith.constant 0 : index
    %c0_13 = arith.constant 0 : index
    %21 = vector.load %arg6[%c0_12, %c0_13] : memref<128x4xf32, #tpu.memory_space<vmem>>, vector<128x4xf32>
    %cst_14 = arith.constant dense<0.000000e+00> : vector<8x4xf32>
    %22 = tpu.matmul %20, %21, %cst_14 {dimension_numbers = #tpu.dot_dimension_numbers<[1], [0], [0], [1], [0, 0, 1, 1], [], []>} : vector<8x128xf32>, vector<128x4xf32>, vector<8x4xf32> -> vector<8x4xf32>
    %c0_15 = arith.constant 0 : index
    %c0_16 = arith.constant 0 : index
    %23 = vector.load %arg7[%c0_15, %c0_16] : memref<1x4xf32, #tpu.memory_space<vmem>>, vector<1x4xf32>
    %24 = vector.broadcast %23 : vector<1x4xf32> to vector<8x4xf32>
    %25 = arith.addf %22, %24 : vector<8x4xf32>
    %cst_17 = arith.constant dense<0xFF800000> : vector<8xf32>
    %26 = vector.multi_reduction <maximumf>, %25, %cst_17 [1] : vector<8x4xf32> to vector<8xf32>
    %27 = vector.shape_cast %26 : vector<8xf32> to vector<8x1xf32>
    %28 = vector.broadcast %27 : vector<8x1xf32> to vector<8x4xf32>
    %29 = arith.subf %25, %28 : vector<8x4xf32>
    %30 = math.exp %29 : vector<8x4xf32>
    %cst_18 = arith.constant dense<0.000000e+00> : vector<8xf32>
    %31 = vector.multi_reduction <add>, %30, %cst_18 [1] : vector<8x4xf32> to vector<8xf32>
    %32 = vector.shape_cast %31 : vector<8xf32> to vector<8x1xf32>
    %33 = tpu.reciprocal %32 : vector<8x1xf32> -> vector<8x1xf32>
    %34 = vector.broadcast %33 : vector<8x1xf32> to vector<8x4xf32>
    %35 = arith.mulf %30, %34 : vector<8x4xf32>
    %c0_19 = arith.constant 0 : index
    %c0_20 = arith.constant 0 : index
    %36 = vector.load %arg8[%c0_19, %c0_20] : memref<8x4xf32, #tpu.memory_space<vmem>>, vector<8x4xf32>
    tpu.vector_store %arg8[%c0_19, %c0_20], %35 {strides = array<i32>} : memref<8x4xf32, #tpu.memory_space<vmem>>, vector<8x4xf32>,
    return
  }
  func.func @transform_0(%arg0: i32) -> (i32, i32) {
    %c0_i32 = arith.constant 0 : i32
    %c0_i32_0 = arith.constant 0 : i32
    return %arg0, %c0_i32 : i32, i32
  }
  func.func @transform_1(%arg0: i32) -> (i32, i32) {
    %c0_i32 = arith.constant 0 : i32
    %c0_i32_0 = arith.constant 0 : i32
    %c0_i32_1 = arith.constant 0 : i32
    return %c0_i32, %c0_i32_0 : i32, i32
  }
  func.func @transform_2(%arg0: i32) -> (i32, i32) {
    %c0_i32 = arith.constant 0 : i32
    %c0_i32_0 = arith.constant 0 : i32
    %c0_i32_1 = arith.constant 0 : i32
    return %c0_i32, %c0_i32_0 : i32, i32
  }
  func.func @transform_3(%arg0: i32) -> (i32, i32) {
    %c0_i32 = arith.constant 0 : i32
    %c0_i32_0 = arith.constant 0 : i32
    %c0_i32_1 = arith.constant 0 : i32
    return %c0_i32, %c0_i32_0 : i32, i32
  }
  func.func @transform_4(%arg0: i32) -> (i32, i32) {
    %c0_i32 = arith.constant 0 : i32
    %c0_i32_0 = arith.constant 0 : i32
    %c0_i32_1 = arith.constant 0 : i32
    return %c0_i32, %c0_i32_0 : i32, i32
  }
  func.func @transform_5(%arg0: i32) -> (i32, i32) {
    %c0_i32 = arith.constant 0 : i32
    %c0_i32_0 = arith.constant 0 : i32
    %c0_i32_1 = arith.constant 0 : i32
    return %c0_i32, %c0_i32_0 : i32, i32
  }
  func.func @transform_6(%arg0: i32) -> (i32, i32) {
    %c0_i32 = arith.constant 0 : i32
    %c0_i32_0 = arith.constant 0 : i32
    %c0_i32_1 = arith.constant 0 : i32
    return %c0_i32, %c0_i32_0 : i32, i32
  }
  func.func @transform_7(%arg0: i32) -> (i32, i32) {
    %c0_i32 = arith.constant 0 : i32
    %c0_i32_0 = arith.constant 0 : i32
    return %arg0, %c0_i32 : i32, i32
  }
}

</mosaic_0001>

<llo_original>
// kernel: neural_network_forward.1
$region0: #{neural_network_forward.1}
  #allocation0 [shape = 'u32[]', space=smem, size = 0x4, offset = 0x4, fixed_abs, tag = 'smem constant byte address 0x4 - core index']
  #allocation1 [shape = 'u32[144,128]{1,0:T(1,128)}', space=vmem, size = 0x12000, scoped, tag = 'internal scratch']
  %s0 = inlined_call_operand.vmem [shape: f32[8,16], index: 0, kind: input, shape index: {}]
  %s1 = inlined_call_operand.hbm [shape: f32[16,128], index: 1, kind: input, shape index: {}]
  %s2 = inlined_call_operand.vmem [shape: f32[1,128], index: 2, kind: input, shape index: {}]
  %s3 = inlined_call_operand.vmem [shape: f32[128,128], index: 3, kind: input, shape index: {}]
  %s4 = inlined_call_operand.hbm [shape: f32[1,128], index: 4, kind: input, shape index: {}]
  %s5 = inlined_call_operand.vmem [shape: f32[128,4], index: 5, kind: input, shape index: {}]
  %s6 = inlined_call_operand.vmem [shape: f32[1,4], index: 6, kind: input, shape index: {}]
  %s7 = inlined_call_operand.vmem [shape: f32[8,4], index: 7, kind: output, shape index: {}]
  %s8 = sld [smem:[#allocation0]]
  $region46: #{neural_network_forward.1} parent=0
    _
  %s10 = ssub.s32 1, %s8
  %s11 = scalar_select 0, %s10, %s8
  $region1: #{neural_network_forward.1} parent=0
    #allocation2 [shape = 'u8[8192]{0}', space=vmem, size = 0x2000, scoped, tag = 'input window, operand 1, single buffered']
    #allocation3 [shape = 's32[1]{0}', space=sflag, size = 0x4, scoped, tag = 'scoped memory for neural_network_forward.1']
    #allocation4 [shape = 'u8[512]{0}', space=vmem, size = 0x400, scoped, tag = 'input window, operand 4, single buffered']
    #allocation5 [shape = 's32[1]{0}', space=sflag, size = 0x4, scoped, tag = 'scoped memory for neural_network_forward.1']
    %12 = vsyncpa [#allocation3], 0
    %13 = vsyncpa [#allocation5], 0
    // Predicated region
    $region2: #{neural_network_forward.1} parent=1 // pred_check
      _
    $region3: #{neural_network_forward.1} parent=1 // pred_check_branch
      %15 = sbr.rel (0) target = $region5
    $region4: #{neural_network_forward.1} parent=1 // pred_region
      _
    $region5: #{neural_network_forward.1} parent=1 // pred_fallthru
      _
    // Predicated region
    $region6: #{neural_network_forward.1} parent=1 // pred_check
      _
    $region7: #{neural_network_forward.1} parent=1 // pred_check_branch
      %17 = sbr.rel (0) target = $region9
    $region8: #{neural_network_forward.1} parent=1 // pred_region
      %s19 = ssub.s32 256, 256
      %20 = vsyncadd [#allocation3], %s19
      %s21 = sshll.u32 [#allocation2], 4
      %s22 = int_to_ptr.vmem [resolvable:$true] %s21
      %27 = dma.hbm_to_vmem [thread:$0]  %s1, 256, %s22, [#allocation3], 128, 128, 8
    $region9: #{neural_network_forward.1} parent=1 // pred_fallthru
      _
    // Predicated region
    $region10: #{neural_network_forward.1} parent=1 // pred_check
      _
    $region11: #{neural_network_forward.1} parent=1 // pred_check_branch
      %29 = sbr.rel (0) target = $region13
    $region12: #{neural_network_forward.1} parent=1 // pred_region
      _
    $region13: #{neural_network_forward.1} parent=1 // pred_fallthru
      _
    // Predicated region
    $region14: #{neural_network_forward.1} parent=1 // pred_check
      _
    $region15: #{neural_network_forward.1} parent=1 // pred_check_branch
      %31 = sbr.rel (0) target = $region17
    $region16: #{neural_network_forward.1} parent=1 // pred_region
      _
    $region17: #{neural_network_forward.1} parent=1 // pred_fallthru
      _
    // Predicated region
    $region18: #{neural_network_forward.1} parent=1 // pred_check
      _
    $region19: #{neural_network_forward.1} parent=1 // pred_check_branch
      %33 = sbr.rel (0) target = $region21
    $region20: #{neural_network_forward.1} parent=1 // pred_region
      %s35 = ssub.s32 16, 16
      %36 = vsyncadd [#allocation5], %s35
      %s38 = sshll.u32 [#allocation4], 4
      %s39 = int_to_ptr.vmem [resolvable:$true] %s38
      %41 = dma.hbm_to_vmem [thread:$0]  %s4, 16, %s39, [#allocation5]
    $region21: #{neural_network_forward.1} parent=1 // pred_fallthru
      _
    // Predicated region
    $region22: #{neural_network_forward.1} parent=1 // pred_check
      _
    $region23: #{neural_network_forward.1} parent=1 // pred_check_branch
      %43 = sbr.rel (0) target = $region25
    $region24: #{neural_network_forward.1} parent=1 // pred_region
      _
    $region25: #{neural_network_forward.1} parent=1 // pred_fallthru
      _
    // Predicated region
    $region26: #{neural_network_forward.1} parent=1 // pred_check
      _
    $region27: #{neural_network_forward.1} parent=1 // pred_check_branch
      %45 = sbr.rel (0) target = $region29
    $region28: #{neural_network_forward.1} parent=1 // pred_region
      _
    $region29: #{neural_network_forward.1} parent=1 // pred_fallthru
      _
    // Predicated region
    $region30: #{neural_network_forward.1} parent=1 // pred_check
      _
    $region31: #{neural_network_forward.1} parent=1 // pred_check_branch
      %47 = sbr.rel (0) target = $region33
    $region32: #{neural_network_forward.1} parent=1 // pred_region
      %48 = dma.done [#allocation3], 256
    $region33: #{neural_network_forward.1} parent=1 // pred_fallthru
      _
    // Predicated region
    $region34: #{neural_network_forward.1} parent=1 // pred_check
      _
    $region35: #{neural_network_forward.1} parent=1 // pred_check_branch
      %50 = sbr.rel (0) target = $region37
    $region36: #{neural_network_forward.1} parent=1 // pred_region
      %51 = dma.done [#allocation5], 16
    $region37: #{neural_network_forward.1} parent=1 // pred_fallthru
      _
    %v52 = vld [vmem:[%s0] sm:$0xff]
    %v53 = vld [vmem:[#allocation2] sm:$0xff]
    %v54 = vld [vmem:[#allocation2 + $0x8] sm:$0xff]
    %v55 = vld [vmem:[%s2] sm:$0x1]
    %v57 = vlaneseq
    %v58 = vshrl.u32 %v57, 7
    %v59 = vsub.s32 0, %v58
    %v60 = vrot.slane %v55, %v59
    %vm62 = vcmask 130048
    %v64 = vsel %vm62, %v52, 0
    %66 = vmatprep.subr.mxu0 0.0
    %67 = vmatpush1.msra.mxu0 0.0
    %68 = vmatprep.subr.mxu0 0.0
    %69 = vmatpush1.msra.mxu0 0.0
    %70 = vmatprep.subr.mxu0 0.0
    %71 = vmatpush1.msra.mxu0 0.0
    %72 = vmatprep.subr.mxu0 0.0
    %73 = vmatpush1.msra.mxu0 0.0
    %74 = vmatprep.subr.mxu0 0.0
    %75 = vmatpush1.msra.mxu0 0.0
    %76 = vmatprep.subr.mxu0 0.0
    %77 = vmatpush1.msra.mxu0 0.0
    %78 = vmatprep.subr.mxu0 0.0
    %79 = vmatpush1.msra.mxu0 0.0
    %80 = vmatprep.subr.mxu0 0.0
    %81 = vmatpush1.msra.mxu0 0.0
    %82 = vmatprep.subr.mxu0 0.0
    %83 = vmatpush1.msra.mxu0 0.0
    %84 = vmatprep.subr.mxu0 0.0
    %85 = vmatpush1.msra.mxu0 0.0
    %86 = vmatprep.subr.mxu0 0.0
    %87 = vmatpush1.msra.mxu0 0.0
    %88 = vmatprep.subr.mxu0 0.0
    %89 = vmatpush1.msra.mxu0 0.0
    %90 = vmatprep.subr.mxu0 0.0
    %91 = vmatpush1.msra.mxu0 0.0
    %92 = vmatprep.subr.mxu0 0.0
    %93 = vmatpush1.msra.mxu0 0.0
    %94 = vmatprep.subr.mxu0 0.0
    %95 = vmatpush1.msra.mxu0 %v54
    %96 = vmatprep.subr.mxu0 0.0
    %97 = vmatpush1.msra.mxu0 %v53
    %98 = vmatprep.subr.mxu0 0.0
    %99 = vmatpush2.msra.mxu0 0.0
    %100 = vmatprep.subr.mxu0 0.0
    %101 = vmatpush2.msra.mxu0 0.0
    %102 = vmatprep.subr.mxu0 0.0
    %103 = vmatpush2.msra.mxu0 0.0
    %104 = vmatprep.subr.mxu0 0.0
    %105 = vmatpush2.msra.mxu0 0.0
    %106 = vmatprep.subr.mxu0 0.0
    %107 = vmatpush2.msra.mxu0 0.0
    %108 = vmatprep.subr.mxu0 0.0
    %109 = vmatpush2.msra.mxu0 0.0
    %110 = vmatprep.subr.mxu0 0.0
    %111 = vmatpush2.msra.mxu0 0.0
    %112 = vmatprep.subr.mxu0 0.0
    %113 = vmatpush2.msra.mxu0 0.0
    %114 = vmatprep.subr.mxu0 0.0
    %115 = vmatpush2.msra.mxu0 0.0
    %116 = vmatprep.subr.mxu0 0.0
    %117 = vmatpush2.msra.mxu0 0.0
    %118 = vmatprep.subr.mxu0 0.0
    %119 = vmatpush2.msra.mxu0 0.0
    %120 = vmatprep.subr.mxu0 0.0
    %121 = vmatpush2.msra.mxu0 0.0
    %122 = vmatprep.subr.mxu0 0.0
    %123 = vmatpush2.msra.mxu0 0.0
    %124 = vmatprep.subr.mxu0 0.0
    %125 = vmatpush2.msra.mxu0 0.0
    %126 = vmatprep.subr.mxu0 0.0
    %127 = vmatpush2.msra.mxu0 0.0
    %128 = vmatprep.subr.mxu0 0.0
    %129 = vmatpush2.msra.mxu0 0.0
    %130 = vmatprep.mubr.f32.mxu0 0.0
    %131 = vmatmul.mubr.f32.gmra.mxu0 %v64
    %v132 = vpop.f32.mrf.mxu0
    %v133 = vadd.f32 %v60, %v132
    %v134 = vpop.f32.mrf.mxu0
    %135 = vdwg.mxu0
    %v136 = vxor.u32 %v133, 2147483648
    %v137 = vmul.f32 %v136, 1.442695
    %v138 = vpow.pop %v137
    %v139 = vadd.f32 %v138, 1.0
    %v140 = vrcp.pop %v139
    %v141 = vmul.f32 1.0, %v140
    %v142 = vld [vmem:[%s3] sm:$0xff]
    %v143 = vld [vmem:[%s3 + $0x8] sm:$0xff]
    %v144 = vld [vmem:[%s3 + $0x10] sm:$0xff]
    %v145 = vld [vmem:[%s3 + $0x18] sm:$0xff]
    %v146 = vld [vmem:[%s3 + $0x20] sm:$0xff]
    %v147 = vld [vmem:[%s3 + $0x28] sm:$0xff]
    %v148 = vld [vmem:[%s3 + $0x30] sm:$0xff]
    %v149 = vld [vmem:[%s3 + $0x38] sm:$0xff]
    %v150 = vld [vmem:[%s3 + $0x40] sm:$0xff]
    %v151 = vld [vmem:[%s3 + $0x48] sm:$0xff]
    %v152 = vld [vmem:[%s3 + $0x50] sm:$0xff]
    %v153 = vld [vmem:[%s3 + $0x58] sm:$0xff]
    %v154 = vld [vmem:[%s3 + $0x60] sm:$0xff]
    %v155 = vld [vmem:[%s3 + $0x68] sm:$0xff]
    %v156 = vld [vmem:[%s3 + $0x70] sm:$0xff]
    %v157 = vld [vmem:[%s3 + $0x78] sm:$0xff]
    %v158 = vld [vmem:[#allocation4] sm:$0x1]
    %v160 = vlaneseq
    %v161 = vshrl.u32 %v160, 7
    %v162 = vsub.s32 0, %v161
    %v163 = vrot.slane %v158, %v162
    %165 = vmatprep.subr.mxu0 0.0
    %166 = vmatpush1.msra.mxu0 %v157
    %167 = vmatprep.subr.mxu0 0.0
    %168 = vmatpush1.msra.mxu0 %v156
    %169 = vmatprep.subr.mxu0 0.0
    %170 = vmatpush1.msra.mxu0 %v155
    %171 = vmatprep.subr.mxu0 0.0
    %172 = vmatpush1.msra.mxu0 %v154
    %173 = vmatprep.subr.mxu0 0.0
    %174 = vmatpush1.msra.mxu0 %v153
    %175 = vmatprep.subr.mxu0 0.0
    %176 = vmatpush1.msra.mxu0 %v152
    %177 = vmatprep.subr.mxu0 0.0
    %178 = vmatpush1.msra.mxu0 %v151
    %179 = vmatprep.subr.mxu0 0.0
    %180 = vmatpush1.msra.mxu0 %v150
    %181 = vmatprep.subr.mxu0 0.0
    %182 = vmatpush1.msra.mxu0 %v149
    %183 = vmatprep.subr.mxu0 0.0
    %184 = vmatpush1.msra.mxu0 %v148
    %185 = vmatprep.subr.mxu0 0.0
    %186 = vmatpush1.msra.mxu0 %v147
    %187 = vmatprep.subr.mxu0 0.0
    %188 = vmatpush1.msra.mxu0 %v146
    %189 = vmatprep.subr.mxu0 0.0
    %190 = vmatpush1.msra.mxu0 %v145
    %191 = vmatprep.subr.mxu0 0.0
    %192 = vmatpush1.msra.mxu0 %v144
    %193 = vmatprep.subr.mxu0 0.0
    %194 = vmatpush1.msra.mxu0 %v143
    %195 = vmatprep.subr.mxu0 0.0
    %196 = vmatpush1.msra.mxu0 %v142
    %197 = vmatprep.subr.mxu0 0.0
    %198 = vmatpush2.msra.mxu0 0.0
    %199 = vmatprep.subr.mxu0 0.0
    %200 = vmatpush2.msra.mxu0 0.0
    %201 = vmatprep.subr.mxu0 0.0
    %202 = vmatpush2.msra.mxu0 0.0
    %203 = vmatprep.subr.mxu0 0.0
    %204 = vmatpush2.msra.mxu0 0.0
    %205 = vmatprep.subr.mxu0 0.0
    %206 = vmatpush2.msra.mxu0 0.0
    %207 = vmatprep.subr.mxu0 0.0
    %208 = vmatpush2.msra.mxu0 0.0
    %209 = vmatprep.subr.mxu0 0.0
    %210 = vmatpush2.msra.mxu0 0.0
    %211 = vmatprep.subr.mxu0 0.0
    %212 = vmatpush2.msra.mxu0 0.0
    %213 = vmatprep.subr.mxu0 0.0
    %214 = vmatpush2.msra.mxu0 0.0
    %215 = vmatprep.subr.mxu0 0.0
    %216 = vmatpush2.msra.mxu0 0.0
    %217 = vmatprep.subr.mxu0 0.0
    %218 = vmatpush2.msra.mxu0 0.0
    %219 = vmatprep.subr.mxu0 0.0
    %220 = vmatpush2.msra.mxu0 0.0
    %221 = vmatprep.subr.mxu0 0.0
    %222 = vmatpush2.msra.mxu0 0.0
    %223 = vmatprep.subr.mxu0 0.0
    %224 = vmatpush2.msra.mxu0 0.0
    %225 = vmatprep.subr.mxu0 0.0
    %226 = vmatpush2.msra.mxu0 0.0
    %227 = vmatprep.subr.mxu0 0.0
    %228 = vmatpush2.msra.mxu0 0.0
    %229 = vmatprep.mubr.f32.mxu0 0.0
    %230 = vmatmul.mubr.f32.gmra.mxu0 %v141
    %v231 = vpop.f32.mrf.mxu0
    %v232 = vadd.f32 %v163, %v231
    %v233 = vpop.f32.mrf.mxu0
    %234 = vdwg.mxu0
    %v235 = vxor.u32 %v232, 2147483648
    %v236 = vmul.f32 %v235, 1.442695
    %v237 = vpow.pop %v236
    %v238 = vadd.f32 %v237, 1.0
    %v239 = vrcp.pop %v238
    %v240 = vmul.f32 1.0, %v239
    %v241 = vld [vmem:[%s5] sm:$0xff]
    %v242 = vld [vmem:[%s5 + $0x8] sm:$0xff]
    %v243 = vld [vmem:[%s5 + $0x10] sm:$0xff]
    %v244 = vld [vmem:[%s5 + $0x18] sm:$0xff]
    %v245 = vld [vmem:[%s5 + $0x20] sm:$0xff]
    %v246 = vld [vmem:[%s5 + $0x28] sm:$0xff]
    %v247 = vld [vmem:[%s5 + $0x30] sm:$0xff]
    %v248 = vld [vmem:[%s5 + $0x38] sm:$0xff]
    %v249 = vld [vmem:[%s5 + $0x40] sm:$0xff]
    %v250 = vld [vmem:[%s5 + $0x48] sm:$0xff]
    %v251 = vld [vmem:[%s5 + $0x50] sm:$0xff]
    %v252 = vld [vmem:[%s5 + $0x58] sm:$0xff]
    %v253 = vld [vmem:[%s5 + $0x60] sm:$0xff]
    %v254 = vld [vmem:[%s5 + $0x68] sm:$0xff]
    %v255 = vld [vmem:[%s5 + $0x70] sm:$0xff]
    %v256 = vld [vmem:[%s5 + $0x78] sm:$0xff]
    %v257 = vld [vmem:[%s6] sm:$0x1]
    %v259 = vlaneseq
    %v260 = vshrl.u32 %v259, 7
    %v261 = vsub.s32 0, %v260
    %v262 = vrot.slane %v257, %v261
    %264 = vmatprep.subr.mxu0 0.0
    %265 = vmatpush1.msra.mxu0 %v256
    %266 = vmatprep.subr.mxu0 0.0
    %267 = vmatpush1.msra.mxu0 %v255
    %268 = vmatprep.subr.mxu0 0.0
    %269 = vmatpush1.msra.mxu0 %v254
    %270 = vmatprep.subr.mxu0 0.0
    %271 = vmatpush1.msra.mxu0 %v253
    %272 = vmatprep.subr.mxu0 0.0
    %273 = vmatpush1.msra.mxu0 %v252
    %274 = vmatprep.subr.mxu0 0.0
    %275 = vmatpush1.msra.mxu0 %v251
    %276 = vmatprep.subr.mxu0 0.0
    %277 = vmatpush1.msra.mxu0 %v250
    %278 = vmatprep.subr.mxu0 0.0
    %279 = vmatpush1.msra.mxu0 %v249
    %280 = vmatprep.subr.mxu0 0.0
    %281 = vmatpush1.msra.mxu0 %v248
    %282 = vmatprep.subr.mxu0 0.0
    %283 = vmatpush1.msra.mxu0 %v247
    %284 = vmatprep.subr.mxu0 0.0
    %285 = vmatpush1.msra.mxu0 %v246
    %286 = vmatprep.subr.mxu0 0.0
    %287 = vmatpush1.msra.mxu0 %v245
    %288 = vmatprep.subr.mxu0 0.0
    %289 = vmatpush1.msra.mxu0 %v244
    %290 = vmatprep.subr.mxu0 0.0
    %291 = vmatpush1.msra.mxu0 %v243
    %292 = vmatprep.subr.mxu0 0.0
    %293 = vmatpush1.msra.mxu0 %v242
    %294 = vmatprep.subr.mxu0 0.0
    %295 = vmatpush1.msra.mxu0 %v241
    %296 = vmatprep.subr.mxu0 0.0
    %297 = vmatpush2.msra.mxu0 0.0
    %298 = vmatprep.subr.mxu0 0.0
    %299 = vmatpush2.msra.mxu0 0.0
    %300 = vmatprep.subr.mxu0 0.0
    %301 = vmatpush2.msra.mxu0 0.0
    %302 = vmatprep.subr.mxu0 0.0
    %303 = vmatpush2.msra.mxu0 0.0
    %304 = vmatprep.subr.mxu0 0.0
    %305 = vmatpush2.msra.mxu0 0.0
    %306 = vmatprep.subr.mxu0 0.0
    %307 = vmatpush2.msra.mxu0 0.0
    %308 = vmatprep.subr.mxu0 0.0
    %309 = vmatpush2.msra.mxu0 0.0
    %310 = vmatprep.subr.mxu0 0.0
    %311 = vmatpush2.msra.mxu0 0.0
    %312 = vmatprep.subr.mxu0 0.0
    %313 = vmatpush2.msra.mxu0 0.0
    %314 = vmatprep.subr.mxu0 0.0
    %315 = vmatpush2.msra.mxu0 0.0
    %316 = vmatprep.subr.mxu0 0.0
    %317 = vmatpush2.msra.mxu0 0.0
    %318 = vmatprep.subr.mxu0 0.0
    %319 = vmatpush2.msra.mxu0 0.0
    %320 = vmatprep.subr.mxu0 0.0
    %321 = vmatpush2.msra.mxu0 0.0
    %322 = vmatprep.subr.mxu0 0.0
    %323 = vmatpush2.msra.mxu0 0.0
    %324 = vmatprep.subr.mxu0 0.0
    %325 = vmatpush2.msra.mxu0 0.0
    %326 = vmatprep.subr.mxu0 0.0
    %327 = vmatpush2.msra.mxu0 0.0
    %328 = vmatprep.mubr.f32.mxu0 0.0
    %329 = vmatmul.mubr.f32.gmra.mxu0 %v240
    %v330 = vpop.f32.mrf.mxu0
    %v331 = vadd.f32 %v262, %v330
    %v332 = vpop.f32.mrf.mxu0
    %333 = vdwg.mxu0
    %vm334 = vcmask 31744
    %v335 = vsel %vm334, %v331, -inf
    %336 = vmax.xlane.f32.xlu0 %v335
    %v337 = vpop.xlane.xlu0 %336
    %v338 = vsub.f32 %v331, %v337
    %v339 = vmul.f32 %v338, 1.442695
    %v340 = vpow.pop %v339
    %v341 = vsel %vm334, %v340, 0.0
    %342 = vadd.xlane.f32.xlu0 %v341
    %v343 = vpop.xlane.xlu0 %342
    %v344 = vrcp.pop %v343
    %v345 = vmul.f32 %v340, %v344
    %346 = vst.msk [vmem:[%s7] sm:$0xff] %vm334, %v345
    // Predicated region
    $region38: #{neural_network_forward.1} parent=1 // pred_check
      _
    $region39: #{neural_network_forward.1} parent=1 // pred_check_branch
      %348 = sbr.rel (0) target = $region41
    $region40: #{neural_network_forward.1} parent=1 // pred_region
      _
    $region41: #{neural_network_forward.1} parent=1 // pred_fallthru
      _
    // Predicated region
    $region42: #{neural_network_forward.1} parent=1 // pred_check
      _
    $region43: #{neural_network_forward.1} parent=1 // pred_check_branch
      %350 = sbr.rel (0) target = $region45
    $region44: #{neural_network_forward.1} parent=1 // pred_region
      _
    $region45: #{neural_network_forward.1} parent=1 // pred_fallthru
      _
    %351 = vsyncpa [#allocation3], 1
    %352 = vsyncpa [#allocation5], 1

</llo_original>
